<compile_context>
chip_gen: v5e
topology: v5e:2x2
jax: 0.10.0
libtpu: 0.0.40
codegen_flags: <defaults>
</compile_context>

<pallas_src>
import functools

import jax
import jax.numpy as jnp
from jax.experimental import pallas as pl
from jax.experimental.pallas import tpu as pltpu


def _round_up(n, m):
    return ((n + m - 1) // m) * m


# ---------------------------------------------------------------------------
# Fused kernel: all layers in one body, activations stay in VMEM/vregs.
# ---------------------------------------------------------------------------

def _fused_mlp_kernel(*refs, out_channels):
    # refs = (x_ref, w0, b0, w1, b1, ..., w_{L-1}, b_{L-1}, o_ref)
    x_ref = refs[0]
    o_ref = refs[-1]
    wb = refs[1:-1]
    num_layers = len(wb) // 2

    h = x_ref[...]                                   # (TM, in_c) bf16
    for l in range(num_layers - 1):
        w = wb[2 * l][...]                           # (k_p, out_p) bf16, BN folded
        b = wb[2 * l + 1][...]                       # (1, out_p)   f32
        y = jnp.dot(h, w, preferred_element_type=jnp.float32)
        # ReLU (dropout = identity in eval); keep the live activation bf16.
        h = jnp.maximum(y + b, 0.0).astype(jnp.bfloat16)

    # Final Linear (f32 weight, tiny) + masked, numerically-stable log_softmax.
    w = wb[-2][...]                                  # (k_p, out_p) f32
    b = wb[-1][...]
    y = jnp.dot(h.astype(jnp.float32), w,
                preferred_element_type=jnp.float32) + b
    col = jax.lax.broadcasted_iota(jnp.int32, y.shape, 1)
    y = jnp.where(col < out_channels, y, -1e30)      # mask lane padding (f32-safe)
    m = jnp.max(y, axis=-1, keepdims=True)
    z = y - m
    lse = jnp.log(jnp.sum(jnp.exp(z), axis=-1, keepdims=True))
    o_ref[...] = z - lse


# ---------------------------------------------------------------------------
# Parameter construction (deterministic, synthetic — mirrors __init__ shapes)
# ---------------------------------------------------------------------------

def init_mlp_params(key, in_channels, hidden_channels, out_channels,
                    num_layers, batchnorm=True):
    dims = [in_channels] + [hidden_channels] * (num_layers - 1) + [out_channels]
    params = []
    for i in range(num_layers):
        fan_in, fan_out = dims[i], dims[i + 1]
        key, kw, kb = jax.random.split(key, 3)
        bound = 1.0 / jnp.sqrt(jnp.float32(fan_in))
        # stored as [in, out] (transpose of PyTorch's [out, in])
        w = jax.random.uniform(kw, (fan_in, fan_out), jnp.float32, -bound, bound)
        b = jax.random.uniform(kb, (fan_out,), jnp.float32, -bound, bound)
        layer = {"w": w, "b": b}
        if batchnorm and i < num_layers - 1:
            key, kg, kbe, km, kv = jax.random.split(key, 5)
            layer["bn_gamma"] = 1.0 + 0.1 * jax.random.normal(kg, (fan_out,), jnp.float32)
            layer["bn_beta"] = 0.1 * jax.random.normal(kbe, (fan_out,), jnp.float32)
            layer["bn_mean"] = 0.1 * jax.random.normal(km, (fan_out,), jnp.float32)
            layer["bn_var"] = jnp.abs(
                1.0 + 0.1 * jax.random.normal(kv, (fan_out,), jnp.float32))
        params.append(layer)
    return params


def prepare_fused_params(params, batchnorm, eps=1e-5):
    """Fold eval-mode BN into (W, b); pad output lanes to 128; bf16 hidden weights.

    Layer 0 keeps its K dim at the native in_channels so it matches the
    unpadded x stream; later layers pad K to the previous layer's 128-padded
    output width (those rows multiply zero-padded activation lanes -> exact).
    The last (classifier) layer's weight stays f32 for accuracy.
    """
    prepared = []
    n_layers = len(params)
    for i, layer in enumerate(params):
        w = layer["w"]                               # [fan_in, fan_out] f32
        b = layer["b"]                               # [fan_out] f32
        last = (i == n_layers - 1)
        if batchnorm and not last:
            scale = layer["bn_gamma"] / jnp.sqrt(layer["bn_var"] + eps)
            shift = layer["bn_beta"] - layer["bn_mean"] * scale
            w = w * scale[None, :]
            b = b * scale + shift
        in_p = w.shape[0] if i == 0 else _round_up(w.shape[0], 128)
        out_p = _round_up(w.shape[1], 128)
        w_p = jnp.zeros((in_p, out_p), jnp.float32).at[: w.shape[0], : w.shape[1]].set(w)
        b_p = jnp.zeros((1, out_p), jnp.float32).at[0, : b.shape[0]].set(b)
        w_dtype = jnp.float32 if last else jnp.bfloat16
        prepared.append((w_p.astype(w_dtype), b_p))
    return prepared


# ---------------------------------------------------------------------------
# Tile / VMEM budget heuristics
# ---------------------------------------------------------------------------

def _choose_tm(n, requested=512):
    """Batch-tile rows: multiple of 16 (bf16 sublane packing).  For batches
    larger than one tile, keep >=2 grid steps (v7x has 2 TensorCores to shard
    the 'parallel' axis) with 256-row alignment (v6e/v7x 256-wide MXU)."""
    if n <= requested:
        return _round_up(n, 16)
    tm = min(requested, _round_up(pl.cdiv(n, 2), 256))
    return _round_up(tm, 16)


def _vmem_limit_bytes(tm, in_c, prepared, single_buffer_weights):
    """Re-derive the VMEM budget from the actual working set; clamp to a value
    that is safe on every generation (v7x has only 64 MiB per TensorCore)."""
    out_p = int(prepared[-1][0].shape[1])
    hid_p = max(int(w.shape[1]) for w, _ in prepared)
    wb = sum(int(w.size) * w.dtype.itemsize + int(b.size) * 4 for w, b in prepared)
    wb *= 1 if single_buffer_weights else 2
    est = (2 * tm * in_c * 2            # double-buffered bf16 x blocks
           + 2 * tm * out_p * 4         # double-buffered f32 out blocks
           + wb                         # resident weights/biases
           + tm * hid_p * (4 + 2))      # live f32 matmul result + bf16 activation
    return min(max(2 * est, 32 << 20), 48 << 20)


# ---------------------------------------------------------------------------
# Forward pass (eval mode) — single fused pallas_call, batch-tiled grid.
# ---------------------------------------------------------------------------

@functools.partial(jax.jit,
                   static_argnames=("out_channels", "tm", "single_buffer_weights"))
def fused_mlp_forward(x, prepared, out_channels, tm=512,
                      single_buffer_weights=True):
    n, in_c = x.shape
    assert in_c == prepared[0][0].shape[0], "x width must match first-layer K"
    out_p = prepared[-1][0].shape[1]

    if x.dtype != jnp.bfloat16:
        x = x.astype(jnp.bfloat16)       # halve input DMA bytes (no host pad)

    tm = _choose_tm(n, tm)
    grid = (pl.cdiv(n, tm),)

    in_specs = [pl.BlockSpec((tm, in_c), lambda i: (i, 0))]
    flat_args = [x]
    for w, b in prepared:                # weights/biases resident across grid
        if single_buffer_weights:
            # Constant index map -> a second buffer is pure VMEM waste.
            in_specs.append(pl.BlockSpec(w.shape, lambda i: (0, 0),
                                         pipeline_mode=pl.Buffered(1)))
            in_specs.append(pl.BlockSpec(b.shape, lambda i: (0, 0),
                                         pipeline_mode=pl.Buffered(1)))
        else:
            in_specs.append(pl.BlockSpec(w.shape, lambda i: (0, 0)))
            in_specs.append(pl.BlockSpec(b.shape, lambda i: (0, 0)))
        flat_args += [w, b]

    flops = 2 * n * sum(int(w.shape[0]) * int(w.shape[1]) for w, _ in prepared)
    bytes_accessed = (int(x.size) * 2 + n * int(out_p) * 4
                      + sum(int(w.size) * w.dtype.itemsize + int(b.size) * 4
                            for w, b in prepared))

    out = pl.pallas_call(
        functools.partial(_fused_mlp_kernel, out_channels=out_channels),
        out_shape=jax.ShapeDtypeStruct((n, out_p), jnp.float32),
        grid=grid,
        in_specs=in_specs,
        out_specs=pl.BlockSpec((tm, out_p), lambda i: (i, 0)),
        compiler_params=pltpu.CompilerParams(
            dimension_semantics=("parallel",),       # megacore-shardable (v7x)
            vmem_limit_bytes=_vmem_limit_bytes(tm, in_c, prepared,
                                               single_buffer_weights),
        ),
        cost_estimate=pl.CostEstimate(
            flops=flops,
            transcendentals=n * int(out_p),
            bytes_accessed=bytes_accessed,
        ),
    )(*flat_args)
    # The kernel stores a lane-dense (tm, 128) slab; the narrow slice is a
    # cheap copy fused under jit (callers that accept the padded slab may skip it).
    return out[:, :out_channels]


# Pure-JAX reference (f32) for a sanity check.
def mlp_forward_ref(x, params, batchnorm, eps=1e-5):
    for layer in params[:-1]:
        y = x @ layer["w"] + layer["b"]
        if batchnorm:
            scale = layer["bn_gamma"] / jnp.sqrt(layer["bn_var"] + eps)
            shift = layer["bn_beta"] - layer["bn_mean"] * scale
            y = y * scale + shift
        x = jnp.maximum(y, 0.0)
    y = x @ params[-1]["w"] + params[-1]["b"]
    return jax.nn.log_softmax(y, axis=-1)


# ---------------------------------------------------------------------------
# Main
# ---------------------------------------------------------------------------

if __name__ == "__main__":
    key = jax.random.PRNGKey(0)
    kx, kp = jax.random.split(key)

    N = 16            # batch (rows)
    IN_C = 32         # in_channels
    HID = 32          # hidden_channels
    OUT_C = 16        # out_channels
    NUM_LAYERS = 3
    DROPOUT = 0.5     # inert in eval mode
    BATCHNORM = True
    # TODO(synk): training-mode dropout / batch-stat BN not implemented; eval
    # semantics only (dropout identity, BN uses running stats folded into W/b).

    x = jax.random.normal(kx, (N, IN_C), jnp.float32)
    params = init_mlp_params(kp, IN_C, HID, OUT_C, NUM_LAYERS, BATCHNORM)
    prepared = prepare_fused_params(params, BATCHNORM)

    try:
        out = jax.block_until_ready(
            fused_mlp_forward(x, prepared, out_channels=OUT_C,
                              single_buffer_weights=True))
    except Exception:
        # TODO(synk): pl.Buffered(1) (single-buffered resident weights) was
        # rejected by this jax/Mosaic build; fall back to default buffering.
        out = jax.block_until_ready(
            fused_mlp_forward(x, prepared, out_channels=OUT_C,
                              single_buffer_weights=False))

    ref = mlp_forward_ref(x, params, BATCHNORM)
    assert out.shape == (N, OUT_C)
    # bf16 streams/hidden weights with f32 accumulation -> loosened tolerance
    assert jnp.allclose(out, ref, atol=5e-2, rtol=5e-2), "mismatch vs reference"

    print("KERNEL_OK")
</pallas_src>

<mosaic_0001>
module attributes {stable_mosaic.version = 11 : i64} {
  func.func @_fused_mlp_kernel(%arg0: i32, %arg1: memref<16x32xbf16, #tpu.memory_space<vmem>>, %arg2: memref<32x128xbf16, #tpu.memory_space<vmem>>, %arg3: memref<1x128xf32, #tpu.memory_space<vmem>>, %arg4: memref<128x128xbf16, #tpu.memory_space<vmem>>, %arg5: memref<1x128xf32, #tpu.memory_space<vmem>>, %arg6: memref<128x128xf32, #tpu.memory_space<vmem>>, %arg7: memref<1x128xf32, #tpu.memory_space<vmem>>, %arg8: memref<16x128xf32, #tpu.memory_space<vmem>>) attributes {dimension_semantics = [#tpu.dimension_semantics<parallel>], iteration_bounds = array<i64: 1>, scalar_prefetch = 0 : i64, scratch_operands = 0 : i64, tpu.core_type = #tpu.core_type<tc>, window_params = [{transform_indices = @transform_0, window_bounds = array<i64: 16, 32>}, {pipeline_mode = #tpu.pipeline_mode<synchronous>, transform_indices = @transform_1, window_bounds = array<i64: 32, 128>}, {pipeline_mode = #tpu.pipeline_mode<synchronous>, transform_indices = @transform_2, window_bounds = array<i64: 1, 128>}, {pipeline_mode = #tpu.pipeline_mode<synchronous>, transform_indices = @transform_3, window_bounds = array<i64: 128, 128>}, {pipeline_mode = #tpu.pipeline_mode<synchronous>, transform_indices = @transform_4, window_bounds = array<i64: 1, 128>}, {pipeline_mode = #tpu.pipeline_mode<synchronous>, transform_indices = @transform_5, window_bounds = array<i64: 128, 128>}, {pipeline_mode = #tpu.pipeline_mode<synchronous>, transform_indices = @transform_6, window_bounds = array<i64: 1, 128>}, {transform_indices = @transform_7, window_bounds = array<i64: 16, 128>}]} {
    %c0 = arith.constant 0 : index
    %c0_0 = arith.constant 0 : index
    %0 = vector.load %arg1[%c0, %c0_0] : memref<16x32xbf16, #tpu.memory_space<vmem>>, vector<16x32xbf16>
    %c0_1 = arith.constant 0 : index
    %c0_2 = arith.constant 0 : index
    %1 = vector.load %arg2[%c0_1, %c0_2] : memref<32x128xbf16, #tpu.memory_space<vmem>>, vector<32x128xbf16>
    %c0_3 = arith.constant 0 : index
    %c0_4 = arith.constant 0 : index
    %2 = vector.load %arg3[%c0_3, %c0_4] : memref<1x128xf32, #tpu.memory_space<vmem>>, vector<1x128xf32>
    %cst = arith.constant dense<0.000000e+00> : vector<16x128xf32>
    %3 = tpu.matmul %0, %1, %cst {dimension_numbers = #tpu.dot_dimension_numbers<[1], [0], [0], [1], [0, 0, 1, 1], [], []>} : vector<16x32xbf16>, vector<32x128xbf16>, vector<16x128xf32> -> vector<16x128xf32>
    %4 = vector.broadcast %2 : vector<1x128xf32> to vector<16x128xf32>
    %5 = arith.addf %3, %4 : vector<16x128xf32>
    %cst_5 = arith.constant 0.000000e+00 : f32
    %6 = vector.broadcast %cst_5 : f32 to vector<16x128xf32>
    %7 = arith.maximumf %5, %6 : vector<16x128xf32>
    %8 = arith.truncf %7 : vector<16x128xf32> to vector<16x128xbf16>
    %c0_6 = arith.constant 0 : index
    %c0_7 = arith.constant 0 : index
    %9 = vector.load %arg4[%c0_6, %c0_7] : memref<128x128xbf16, #tpu.memory_space<vmem>>, vector<128x128xbf16>
    %c0_8 = arith.constant 0 : index
    %c0_9 = arith.constant 0 : index
    %10 = vector.load %arg5[%c0_8, %c0_9] : memref<1x128xf32, #tpu.memory_space<vmem>>, vector<1x128xf32>
    %cst_10 = arith.constant dense<0.000000e+00> : vector<16x128xf32>
    %11 = tpu.matmul %8, %9, %cst_10 {dimension_numbers = #tpu.dot_dimension_numbers<[1], [0], [0], [1], [0, 0, 1, 1], [], []>} : vector<16x128xbf16>, vector<128x128xbf16>, vector<16x128xf32> -> vector<16x128xf32>
    %12 = vector.broadcast %10 : vector<1x128xf32> to vector<16x128xf32>
    %13 = arith.addf %11, %12 : vector<16x128xf32>
    %cst_11 = arith.constant 0.000000e+00 : f32
    %14 = vector.broadcast %cst_11 : f32 to vector<16x128xf32>
    %15 = arith.maximumf %13, %14 : vector<16x128xf32>
    %16 = arith.truncf %15 : vector<16x128xf32> to vector<16x128xbf16>
    %c0_12 = arith.constant 0 : index
    %c0_13 = arith.constant 0 : index
    %17 = vector.load %arg6[%c0_12, %c0_13] : memref<128x128xf32, #tpu.memory_space<vmem>>, vector<128x128xf32>
    %c0_14 = arith.constant 0 : index
    %c0_15 = arith.constant 0 : index
    %18 = vector.load %arg7[%c0_14, %c0_15] : memref<1x128xf32, #tpu.memory_space<vmem>>, vector<1x128xf32>
    %19 = arith.extf %16 : vector<16x128xbf16> to vector<16x128xf32>
    %cst_16 = arith.constant dense<0.000000e+00> : vector<16x128xf32>
    %20 = tpu.matmul %19, %17, %cst_16 {dimension_numbers = #tpu.dot_dimension_numbers<[1], [0], [0], [1], [0, 0, 1, 1], [], []>} : vector<16x128xf32>, vector<128x128xf32>, vector<16x128xf32> -> vector<16x128xf32>
    %21 = vector.broadcast %18 : vector<1x128xf32> to vector<16x128xf32>
    %22 = arith.addf %20, %21 : vector<16x128xf32>
    %23 = tpu.iota {dimensions = array<i32: 1>} : vector<16x128xi32>
    %c16_i32 = arith.constant 16 : i32
    %24 = vector.broadcast %c16_i32 : i32 to vector<16x128xi32>
    %25 = arith.cmpi slt, %23, %24 : vector<16x128xi32>
    %cst_17 = arith.constant -1.000000e+30 : f32
    %26 = vector.broadcast %cst_17 : f32 to vector<16x128xf32>
    %27 = arith.select %25, %22, %26 : vector<16x128xi1>, vector<16x128xf32>
    %cst_18 = arith.constant dense<0xFF800000> : vector<16xf32>
    %28 = vector.multi_reduction <maximumf>, %27, %cst_18 [1] : vector<16x128xf32> to vector<16xf32>
    %29 = vector.shape_cast %28 : vector<16xf32> to vector<16x1xf32>
    %30 = vector.broadcast %29 : vector<16x1xf32> to vector<16x128xf32>
    %31 = arith.subf %27, %30 : vector<16x128xf32>
    %32 = math.exp %31 : vector<16x128xf32>
    %cst_19 = arith.constant dense<0.000000e+00> : vector<16xf32>
    %33 = vector.multi_reduction <add>, %32, %cst_19 [1] : vector<16x128xf32> to vector<16xf32>
    %34 = vector.shape_cast %33 : vector<16xf32> to vector<16x1xf32>
    %35 = math.log %34 : vector<16x1xf32>
    %36 = vector.broadcast %35 : vector<16x1xf32> to vector<16x128xf32>
    %37 = arith.subf %31, %36 : vector<16x128xf32>
    %c0_20 = arith.constant 0 : index
    %c0_21 = arith.constant 0 : index
    %38 = vector.load %arg8[%c0_20, %c0_21] : memref<16x128xf32, #tpu.memory_space<vmem>>, vector<16x128xf32>
    tpu.vector_store %arg8[%c0_20, %c0_21], %37 {strides = array<i32>} : memref<16x128xf32, #tpu.memory_space<vmem>>, vector<16x128xf32>,
    return
  }
  func.func @transform_0(%arg0: i32) -> (i32, i32) {
    %c0_i32 = arith.constant 0 : i32
    %c0_i32_0 = arith.constant 0 : i32
    return %arg0, %c0_i32 : i32, i32
  }
  func.func @transform_1(%arg0: i32) -> (i32, i32) {
    %c0_i32 = arith.constant 0 : i32
    %c0_i32_0 = arith.constant 0 : i32
    %c0_i32_1 = arith.constant 0 : i32
    return %c0_i32, %c0_i32_0 : i32, i32
  }
  func.func @transform_2(%arg0: i32) -> (i32, i32) {
    %c0_i32 = arith.constant 0 : i32
    %c0_i32_0 = arith.constant 0 : i32
    %c0_i32_1 = arith.constant 0 : i32
    return %c0_i32, %c0_i32_0 : i32, i32
  }
  func.func @transform_3(%arg0: i32) -> (i32, i32) {
    %c0_i32 = arith.constant 0 : i32
    %c0_i32_0 = arith.constant 0 : i32
    %c0_i32_1 = arith.constant 0 : i32
    return %c0_i32, %c0_i32_0 : i32, i32
  }
  func.func @transform_4(%arg0: i32) -> (i32, i32) {
    %c0_i32 = arith.constant 0 : i32
    %c0_i32_0 = arith.constant 0 : i32
    %c0_i32_1 = arith.constant 0 : i32
    return %c0_i32, %c0_i32_0 : i32, i32
  }
  func.func @transform_5(%arg0: i32) -> (i32, i32) {
    %c0_i32 = arith.constant 0 : i32
    %c0_i32_0 = arith.constant 0 : i32
    %c0_i32_1 = arith.constant 0 : i32
    return %c0_i32, %c0_i32_0 : i32, i32
  }
  func.func @transform_6(%arg0: i32) -> (i32, i32) {
    %c0_i32 = arith.constant 0 : i32
    %c0_i32_0 = arith.constant 0 : i32
    %c0_i32_1 = arith.constant 0 : i32
    return %c0_i32, %c0_i32_0 : i32, i32
  }
  func.func @transform_7(%arg0: i32) -> (i32, i32) {
    %c0_i32 = arith.constant 0 : i32
    %c0_i32_0 = arith.constant 0 : i32
    return %arg0, %c0_i32 : i32, i32
  }
}

module attributes {stable_mosaic.version = 11 : i64} {
  func.func @_fused_mlp_kernel(%arg0: i32, %arg1: memref<16x32xbf16, #tpu.memory_space<vmem>>, %arg2: memref<32x128xbf16, #tpu.memory_space<vmem>>, %arg3: memref<1x128xf32, #tpu.memory_space<vmem>>, %arg4: memref<128x128xbf16, #tpu.memory_space<vmem>>, %arg5: memref<1x128xf32, #tpu.memory_space<vmem>>, %arg6: memref<128x128xf32, #tpu.memory_space<vmem>>, %arg7: memref<1x128xf32, #tpu.memory_space<vmem>>, %arg8: memref<16x128xf32, #tpu.memory_space<vmem>>) attributes {dimension_semantics = [#tpu.dimension_semantics<parallel>], iteration_bounds = array<i64: 1>, scalar_prefetch = 0 : i64, scratch_operands = 0 : i64, tpu.core_type = #tpu.core_type<tc>, window_params = [{transform_indices = @transform_0, window_bounds = array<i64: 16, 32>}, {pipeline_mode = #tpu.pipeline_mode<synchronous>, transform_indices = @transform_1, window_bounds = array<i64: 32, 128>}, {pipeline_mode = #tpu.pipeline_mode<synchronous>, transform_indices = @transform_2, window_bounds = array<i64: 1, 128>}, {pipeline_mode = #tpu.pipeline_mode<synchronous>, transform_indices = @transform_3, window_bounds = array<i64: 128, 128>}, {pipeline_mode = #tpu.pipeline_mode<synchronous>, transform_indices = @transform_4, window_bounds = array<i64: 1, 128>}, {pipeline_mode = #tpu.pipeline_mode<synchronous>, transform_indices = @transform_5, window_bounds = array<i64: 128, 128>}, {pipeline_mode = #tpu.pipeline_mode<synchronous>, transform_indices = @transform_6, window_bounds = array<i64: 1, 128>}, {transform_indices = @transform_7, window_bounds = array<i64: 16, 128>}]} {
    %c0 = arith.constant 0 : index
    %c0_0 = arith.constant 0 : index
    %0 = vector.load %arg1[%c0, %c0_0] : memref<16x32xbf16, #tpu.memory_space<vmem>>, vector<16x32xbf16>
    %c0_1 = arith.constant 0 : index
    %c0_2 = arith.constant 0 : index
    %1 = vector.load %arg2[%c0_1, %c0_2] : memref<32x128xbf16, #tpu.memory_space<vmem>>, vector<32x128xbf16>
    %c0_3 = arith.constant 0 : index
    %c0_4 = arith.constant 0 : index
    %2 = vector.load %arg3[%c0_3, %c0_4] : memref<1x128xf32, #tpu.memory_space<vmem>>, vector<1x128xf32>
    %cst = arith.constant dense<0.000000e+00> : vector<16x128xf32>
    %3 = tpu.matmul %0, %1, %cst {dimension_numbers = #tpu.dot_dimension_numbers<[1], [0], [0], [1], [0, 0, 1, 1], [], []>} : vector<16x32xbf16>, vector<32x128xbf16>, vector<16x128xf32> -> vector<16x128xf32>
    %4 = vector.broadcast %2 : vector<1x128xf32> to vector<16x128xf32>
    %5 = arith.addf %3, %4 : vector<16x128xf32>
    %cst_5 = arith.constant 0.000000e+00 : f32
    %6 = vector.broadcast %cst_5 : f32 to vector<16x128xf32>
    %7 = arith.maximumf %5, %6 : vector<16x128xf32>
    %8 = arith.truncf %7 : vector<16x128xf32> to vector<16x128xbf16>
    %c0_6 = arith.constant 0 : index
    %c0_7 = arith.constant 0 : index
    %9 = vector.load %arg4[%c0_6, %c0_7] : memref<128x128xbf16, #tpu.memory_space<vmem>>, vector<128x128xbf16>
    %c0_8 = arith.constant 0 : index
    %c0_9 = arith.constant 0 : index
    %10 = vector.load %arg5[%c0_8, %c0_9] : memref<1x128xf32, #tpu.memory_space<vmem>>, vector<1x128xf32>
    %cst_10 = arith.constant dense<0.000000e+00> : vector<16x128xf32>
    %11 = tpu.matmul %8, %9, %cst_10 {dimension_numbers = #tpu.dot_dimension_numbers<[1], [0], [0], [1], [0, 0, 1, 1], [], []>} : vector<16x128xbf16>, vector<128x128xbf16>, vector<16x128xf32> -> vector<16x128xf32>
    %12 = vector.broadcast %10 : vector<1x128xf32> to vector<16x128xf32>
    %13 = arith.addf %11, %12 : vector<16x128xf32>
    %cst_11 = arith.constant 0.000000e+00 : f32
    %14 = vector.broadcast %cst_11 : f32 to vector<16x128xf32>
    %15 = arith.maximumf %13, %14 : vector<16x128xf32>
    %16 = arith.truncf %15 : vector<16x128xf32> to vector<16x128xbf16>
    %c0_12 = arith.constant 0 : index
    %c0_13 = arith.constant 0 : index
    %17 = vector.load %arg6[%c0_12, %c0_13] : memref<128x128xf32, #tpu.memory_space<vmem>>, vector<128x128xf32>
    %c0_14 = arith.constant 0 : index
    %c0_15 = arith.constant 0 : index
    %18 = vector.load %arg7[%c0_14, %c0_15] : memref<1x128xf32, #tpu.memory_space<vmem>>, vector<1x128xf32>
    %19 = arith.extf %16 : vector<16x128xbf16> to vector<16x128xf32>
    %cst_16 = arith.constant dense<0.000000e+00> : vector<16x128xf32>
    %20 = tpu.matmul %19, %17, %cst_16 {dimension_numbers = #tpu.dot_dimension_numbers<[1], [0], [0], [1], [0, 0, 1, 1], [], []>} : vector<16x128xf32>, vector<128x128xf32>, vector<16x128xf32> -> vector<16x128xf32>
    %21 = vector.broadcast %18 : vector<1x128xf32> to vector<16x128xf32>
    %22 = arith.addf %20, %21 : vector<16x128xf32>
    %23 = tpu.iota {dimensions = array<i32: 1>} : vector<16x128xi32>
    %c16_i32 = arith.constant 16 : i32
    %24 = vector.broadcast %c16_i32 : i32 to vector<16x128xi32>
    %25 = arith.cmpi slt, %23, %24 : vector<16x128xi32>
    %cst_17 = arith.constant -1.000000e+30 : f32
    %26 = vector.broadcast %cst_17 : f32 to vector<16x128xf32>
    %27 = arith.select %25, %22, %26 : vector<16x128xi1>, vector<16x128xf32>
    %cst_18 = arith.constant dense<0xFF800000> : vector<16xf32>
    %28 = vector.multi_reduction <maximumf>, %27, %cst_18 [1] : vector<16x128xf32> to vector<16xf32>
    %29 = vector.shape_cast %28 : vector<16xf32> to vector<16x1xf32>
    %30 = vector.broadcast %29 : vector<16x1xf32> to vector<16x128xf32>
    %31 = arith.subf %27, %30 : vector<16x128xf32>
    %32 = math.exp %31 : vector<16x128xf32>
    %cst_19 = arith.constant dense<0.000000e+00> : vector<16xf32>
    %33 = vector.multi_reduction <add>, %32, %cst_19 [1] : vector<16x128xf32> to vector<16xf32>
    %34 = vector.shape_cast %33 : vector<16xf32> to vector<16x1xf32>
    %35 = math.log %34 : vector<16x1xf32>
    %36 = vector.broadcast %35 : vector<16x1xf32> to vector<16x128xf32>
    %37 = arith.subf %31, %36 : vector<16x128xf32>
    %c0_20 = arith.constant 0 : index
    %c0_21 = arith.constant 0 : index
    %38 = vector.load %arg8[%c0_20, %c0_21] : memref<16x128xf32, #tpu.memory_space<vmem>>, vector<16x128xf32>
    tpu.vector_store %arg8[%c0_20, %c0_21], %37 {strides = array<i32>} : memref<16x128xf32, #tpu.memory_space<vmem>>, vector<16x128xf32>,
    return
  }
  func.func @transform_0(%arg0: i32) -> (i32, i32) {
    %c0_i32 = arith.constant 0 : i32
    %c0_i32_0 = arith.constant 0 : i32
    return %arg0, %c0_i32 : i32, i32
  }
  func.func @transform_1(%arg0: i32) -> (i32, i32) {
    %c0_i32 = arith.constant 0 : i32
    %c0_i32_0 = arith.constant 0 : i32
    %c0_i32_1 = arith.constant 0 : i32
    return %c0_i32, %c0_i32_0 : i32, i32
  }
  func.func @transform_2(%arg0: i32) -> (i32, i32) {
    %c0_i32 = arith.constant 0 : i32
    %c0_i32_0 = arith.constant 0 : i32
    %c0_i32_1 = arith.constant 0 : i32
    return %c0_i32, %c0_i32_0 : i32, i32
  }
  func.func @transform_3(%arg0: i32) -> (i32, i32) {
    %c0_i32 = arith.constant 0 : i32
    %c0_i32_0 = arith.constant 0 : i32
    %c0_i32_1 = arith.constant 0 : i32
    return %c0_i32, %c0_i32_0 : i32, i32
  }
  func.func @transform_4(%arg0: i32) -> (i32, i32) {
    %c0_i32 = arith.constant 0 : i32
    %c0_i32_0 = arith.constant 0 : i32
    %c0_i32_1 = arith.constant 0 : i32
    return %c0_i32, %c0_i32_0 : i32, i32
  }
  func.func @transform_5(%arg0: i32) -> (i32, i32) {
    %c0_i32 = arith.constant 0 : i32
    %c0_i32_0 = arith.constant 0 : i32
    %c0_i32_1 = arith.constant 0 : i32
    return %c0_i32, %c0_i32_0 : i32, i32
  }
  func.func @transform_6(%arg0: i32) -> (i32, i32) {
    %c0_i32 = arith.constant 0 : i32
    %c0_i32_0 = arith.constant 0 : i32
    %c0_i32_1 = arith.constant 0 : i32
    return %c0_i32, %c0_i32_0 : i32, i32
  }
  func.func @transform_7(%arg0: i32) -> (i32, i32) {
    %c0_i32 = arith.constant 0 : i32
    %c0_i32_0 = arith.constant 0 : i32
    return %arg0, %c0_i32 : i32, i32
  }
}

</mosaic_0001>

<llo_original>
// kernel: fused_mlp_forward.1
$region0: #{fused_mlp_forward.1}
  #allocation0 [shape = 'u32[]', space=smem, size = 0x4, offset = 0x4, fixed_abs, tag = 'smem constant byte address 0x4 - core index']
  #allocation1 [shape = 'u32[72,128]{1,0:T(1,128)}', space=vmem, size = 0x9000, scoped, tag = 'internal scratch']
  %s0 = inlined_call_operand.vmem [shape: bf16[16,32], index: 0, kind: input, shape index: {}]
  %s1 = inlined_call_operand.vmem [shape: bf16[32,128], index: 1, kind: input, shape index: {}]
  %s2 = inlined_call_operand.vmem [shape: f32[1,128], index: 2, kind: input, shape index: {}]
  %s3 = inlined_call_operand.hbm [shape: bf16[128,128], index: 3, kind: input, shape index: {}]
  %s4 = inlined_call_operand.vmem [shape: f32[1,128], index: 4, kind: input, shape index: {}]
  %s5 = inlined_call_operand.hbm [shape: f32[128,128], index: 5, kind: input, shape index: {}]
  %s6 = inlined_call_operand.vmem [shape: f32[1,128], index: 6, kind: input, shape index: {}]
  %s7 = inlined_call_operand.hbm [shape: f32[16,128], index: 7, kind: output, shape index: {}]
  %s8 = sld [smem:[#allocation0]]
  $region46: #{fused_mlp_forward.1} parent=0
    _
  %s10 = ssub.s32 1, %s8
  %s11 = scalar_select 0, %s10, %s8
  $region1: #{fused_mlp_forward.1} parent=0
    #allocation2 [shape = 'u8[32768]{0}', space=vmem, size = 0x8000, scoped, tag = 'input window, operand 3, single buffered']
    #allocation3 [shape = 's32[1]{0}', space=sflag, size = 0x4, scoped, tag = 'scoped memory for fused_mlp_forward.1']
    #allocation4 [shape = 's32[1]{0}', space=sflag, size = 0x4, scoped, tag = 'scoped memory for fused_mlp_forward.1']
    #allocation5 [shape = 'u8[65536]{0}', space=vmem, size = 0x10000, scoped, tag = 'input window, operand 5, single buffered']
    #allocation6 [shape = 's32[1]{0}', space=sflag, size = 0x4, scoped, tag = 'scoped memory for fused_mlp_forward.1']
    #allocation7 [shape = 'u8[8192]{0}', space=vmem, size = 0x2000, scoped, tag = 'output window, operand 0, single buffered']
    %12 = vsyncpa [#allocation3], 0
    %13 = vsyncpa [#allocation6], 0
    %14 = vsyncpa [#allocation4], 0
    // Predicated region
    $region2: #{fused_mlp_forward.1} parent=1 // pred_check
      _
    $region3: #{fused_mlp_forward.1} parent=1 // pred_check_branch
      %16 = sbr.rel (0) target = $region5
    $region4: #{fused_mlp_forward.1} parent=1 // pred_region
      _
    $region5: #{fused_mlp_forward.1} parent=1 // pred_fallthru
      _
    // Predicated region
    $region6: #{fused_mlp_forward.1} parent=1 // pred_check
      _
    $region7: #{fused_mlp_forward.1} parent=1 // pred_check_branch
      %18 = sbr.rel (0) target = $region9
    $region8: #{fused_mlp_forward.1} parent=1 // pred_region
      _
    $region9: #{fused_mlp_forward.1} parent=1 // pred_fallthru
      _
    // Predicated region
    $region10: #{fused_mlp_forward.1} parent=1 // pred_check
      _
    $region11: #{fused_mlp_forward.1} parent=1 // pred_check_branch
      %20 = sbr.rel (0) target = $region13
    $region12: #{fused_mlp_forward.1} parent=1 // pred_region
      _
    $region13: #{fused_mlp_forward.1} parent=1 // pred_fallthru
      _
    // Predicated region
    $region14: #{fused_mlp_forward.1} parent=1 // pred_check
      _
    $region15: #{fused_mlp_forward.1} parent=1 // pred_check_branch
      %22 = sbr.rel (0) target = $region17
    $region16: #{fused_mlp_forward.1} parent=1 // pred_region
      %24 = vsyncadd [#allocation3], 0
      %s25 = sshll.u32 %s3, 4
      %s26 = int_to_ptr.hbm [resolvable:$true] %s25
      %s27 = sshll.u32 [#allocation2], 4
      %s28 = int_to_ptr.vmem [resolvable:$true] %s27
      %33 = dma.hbm_to_vmem [thread:$0]  %s26, 1024, %s28, [#allocation3], 64, 64, 4
    $region17: #{fused_mlp_forward.1} parent=1 // pred_fallthru
      _
    // Predicated region
    $region18: #{fused_mlp_forward.1} parent=1 // pred_check
      _
    $region19: #{fused_mlp_forward.1} parent=1 // pred_check_branch
      %35 = sbr.rel (0) target = $region21
    $region20: #{fused_mlp_forward.1} parent=1 // pred_region
      _
    $region21: #{fused_mlp_forward.1} parent=1 // pred_fallthru
      _
    // Predicated region
    $region22: #{fused_mlp_forward.1} parent=1 // pred_check
      _
    $region23: #{fused_mlp_forward.1} parent=1 // pred_check_branch
      %37 = sbr.rel (0) target = $region25
    $region24: #{fused_mlp_forward.1} parent=1 // pred_region
      %39 = vsyncadd [#allocation6], 0
      %s40 = sshll.u32 %s5, 4
      %s41 = int_to_ptr.hbm [resolvable:$true] %s40
      %s42 = sshll.u32 [#allocation5], 4
      %s43 = int_to_ptr.vmem [resolvable:$true] %s42
      %48 = dma.hbm_to_vmem [thread:$0]  %s41, 2048, %s43, [#allocation6], 128, 128, 8
    $region25: #{fused_mlp_forward.1} parent=1 // pred_fallthru
      _
    // Predicated region
    $region26: #{fused_mlp_forward.1} parent=1 // pred_check
      _
    $region27: #{fused_mlp_forward.1} parent=1 // pred_check_branch
      %50 = sbr.rel (0) target = $region29
    $region28: #{fused_mlp_forward.1} parent=1 // pred_region
      _
    $region29: #{fused_mlp_forward.1} parent=1 // pred_fallthru
      _
    // Predicated region
    $region30: #{fused_mlp_forward.1} parent=1 // pred_check
      _
    $region31: #{fused_mlp_forward.1} parent=1 // pred_check_branch
      %52 = sbr.rel (0) target = $region33
    $region32: #{fused_mlp_forward.1} parent=1 // pred_region
      %54 = dma.done [#allocation3], 1024
    $region33: #{fused_mlp_forward.1} parent=1 // pred_fallthru
      _
    // Predicated region
    $region34: #{fused_mlp_forward.1} parent=1 // pred_check
      _
    $region35: #{fused_mlp_forward.1} parent=1 // pred_check_branch
      %56 = sbr.rel (0) target = $region37
    $region36: #{fused_mlp_forward.1} parent=1 // pred_region
      %58 = dma.done [#allocation6], 2048
    $region37: #{fused_mlp_forward.1} parent=1 // pred_fallthru
      _
    %v60 = vld [vmem:[%s0] sm:$0xf]
    %v61 = vld [vmem:[%s0 + $0x4] sm:$0xf]
    %v62 = vld [vmem:[%s1] sm:$0xf]
    %v63 = vld [vmem:[%s1 + $0x4] sm:$0xf]
    %v64 = vld [vmem:[%s1 + $0x8] sm:$0xf]
    %v65 = vld [vmem:[%s1 + $0xc] sm:$0xf]
    %v66 = vld [vmem:[%s2] sm:$0x1]
    %v68 = vperm.slane %v66, 0
    %v72 = vunpack.c.l.b16 %v60
    %v73 = vunpack.c.l.b16 %v61
    %v74 = vpack.c.b16 %v73, %v72
    %v79 = vunpack.c.l.b16 %v62
    %v80 = vunpack.c.l.b16 %v63
    %v81 = vunpack.c.l.b16 %v64
    %v82 = vunpack.c.l.b16 %v65
    %v83 = vpack.c.b16 %v80, %v79
    %v84 = vpack.c.b16 %v82, %v81
    %vm87 = vcmask 261120
    %v89 = vsel %vm87, %v74, 0
    %91 = vmatpush.bf16.msra.mxu0 0
    %92 = vmatpush.bf16.msra.mxu0 0
    %93 = vmatpush.bf16.msra.mxu0 0
    %94 = vmatpush.bf16.msra.mxu0 0
    %95 = vmatpush.bf16.msra.mxu0 0
    %96 = vmatpush.bf16.msra.mxu0 0
    %97 = vmatpush.bf16.msra.mxu0 %v84
    %98 = vmatpush.bf16.msra.mxu0 %v83
    %99 = vmatmul.bf16.gmra.mxu0 %v89
    %v100 = vpop.f32.mrf.mxu0
    %v101 = vadd.f32 %v68, %v100
    %v102 = vpop.f32.mrf.mxu0
    %v103 = vadd.f32 %v68, %v102
    %104 = vdwg.mxu0
    %v105 = vmax.f32 %v101, 0.0
    %v106 = vmax.f32 %v103, 0.0
    %v107 = vpack.c.bf16 %v106, %v105
    %v108 = vld [vmem:[#allocation2] sm:$0xf]
    %v109 = vld [vmem:[#allocation2 + $0x4] sm:$0xf]
    %v110 = vld [vmem:[#allocation2 + $0x8] sm:$0xf]
    %v111 = vld [vmem:[#allocation2 + $0xc] sm:$0xf]
    %v112 = vld [vmem:[#allocation2 + $0x10] sm:$0xf]
    %v113 = vld [vmem:[#allocation2 + $0x14] sm:$0xf]
    %v114 = vld [vmem:[#allocation2 + $0x18] sm:$0xf]
    %v115 = vld [vmem:[#allocation2 + $0x1c] sm:$0xf]
    %v116 = vld [vmem:[#allocation2 + $0x20] sm:$0xf]
    %v117 = vld [vmem:[#allocation2 + $0x24] sm:$0xf]
    %v118 = vld [vmem:[#allocation2 + $0x28] sm:$0xf]
    %v119 = vld [vmem:[#allocation2 + $0x2c] sm:$0xf]
    %v120 = vld [vmem:[#allocation2 + $0x30] sm:$0xf]
    %v121 = vld [vmem:[#allocation2 + $0x34] sm:$0xf]
    %v122 = vld [vmem:[#allocation2 + $0x38] sm:$0xf]
    %v123 = vld [vmem:[#allocation2 + $0x3c] sm:$0xf]
    %v124 = vld [vmem:[%s4] sm:$0x1]
    %v126 = vperm.slane %v124, 0
    %v144 = vunpack.c.l.b16 %v108
    %v145 = vunpack.c.l.b16 %v109
    %v146 = vunpack.c.l.b16 %v110
    %v147 = vunpack.c.l.b16 %v111
    %v148 = vunpack.c.l.b16 %v112
    %v149 = vunpack.c.l.b16 %v113
    %v150 = vunpack.c.l.b16 %v114
    %v151 = vunpack.c.l.b16 %v115
    %v152 = vunpack.c.l.b16 %v116
    %v153 = vunpack.c.l.b16 %v117
    %v154 = vunpack.c.l.b16 %v118
    %v155 = vunpack.c.l.b16 %v119
    %v156 = vunpack.c.l.b16 %v120
    %v157 = vunpack.c.l.b16 %v121
    %v158 = vunpack.c.l.b16 %v122
    %v159 = vunpack.c.l.b16 %v123
    %v160 = vpack.c.b16 %v145, %v144
    %v161 = vpack.c.b16 %v147, %v146
    %v162 = vpack.c.b16 %v149, %v148
    %v163 = vpack.c.b16 %v151, %v150
    %v164 = vpack.c.b16 %v153, %v152
    %v165 = vpack.c.b16 %v155, %v154
    %v166 = vpack.c.b16 %v157, %v156
    %v167 = vpack.c.b16 %v159, %v158
    %176 = vmatpush.bf16.msra.mxu0 %v167
    %177 = vmatpush.bf16.msra.mxu0 %v166
    %178 = vmatpush.bf16.msra.mxu0 %v165
    %179 = vmatpush.bf16.msra.mxu0 %v164
    %180 = vmatpush.bf16.msra.mxu0 %v163
    %181 = vmatpush.bf16.msra.mxu0 %v162
    %182 = vmatpush.bf16.msra.mxu0 %v161
    %183 = vmatpush.bf16.msra.mxu0 %v160
    %184 = vmatmul.bf16.gmra.mxu0 %v107
    %v185 = vpop.f32.mrf.mxu0
    %v186 = vadd.f32 %v126, %v185
    %v187 = vpop.f32.mrf.mxu0
    %v188 = vadd.f32 %v126, %v187
    %189 = vdwg.mxu0
    %v190 = vmax.f32 %v186, 0.0
    %v191 = vmax.f32 %v188, 0.0
    %v192 = vpack.c.bf16 %v191, %v190
    %v193 = vld [vmem:[#allocation5] sm:$0xff]
    %v194 = vld [vmem:[#allocation5 + $0x8] sm:$0xff]
    %v195 = vld [vmem:[#allocation5 + $0x10] sm:$0xff]
    %v196 = vld [vmem:[#allocation5 + $0x18] sm:$0xff]
    %v197 = vld [vmem:[#allocation5 + $0x20] sm:$0xff]
    %v198 = vld [vmem:[#allocation5 + $0x28] sm:$0xff]
    %v199 = vld [vmem:[#allocation5 + $0x30] sm:$0xff]
    %v200 = vld [vmem:[#allocation5 + $0x38] sm:$0xff]
    %v201 = vld [vmem:[#allocation5 + $0x40] sm:$0xff]
    %v202 = vld [vmem:[#allocation5 + $0x48] sm:$0xff]
    %v203 = vld [vmem:[#allocation5 + $0x50] sm:$0xff]
    %v204 = vld [vmem:[#allocation5 + $0x58] sm:$0xff]
    %v205 = vld [vmem:[#allocation5 + $0x60] sm:$0xff]
    %v206 = vld [vmem:[#allocation5 + $0x68] sm:$0xff]
    %v207 = vld [vmem:[#allocation5 + $0x70] sm:$0xff]
    %v208 = vld [vmem:[#allocation5 + $0x78] sm:$0xff]
    %v209 = vld [vmem:[%s6] sm:$0x1]
    %v210 = vunpack.c.l.bf16 %v192
    %v211 = vunpack.c.h.bf16 %v192
    %v213 = vperm.slane %v209, 0
    %215 = vmatpush.msra.mxu0 %v208
    %216 = vmatpush.msra.mxu0 %v207
    %217 = vmatpush.msra.mxu0 %v206
    %218 = vmatpush.msra.mxu0 %v205
    %219 = vmatpush.msra.mxu0 %v204
    %220 = vmatpush.msra.mxu0 %v203
    %221 = vmatpush.msra.mxu0 %v202
    %222 = vmatpush.msra.mxu0 %v201
    %223 = vmatpush.msra.mxu0 %v200
    %224 = vmatpush.msra.mxu0 %v199
    %225 = vmatpush.msra.mxu0 %v198
    %226 = vmatpush.msra.mxu0 %v197
    %227 = vmatpush.msra.mxu0 %v196
    %228 = vmatpush.msra.mxu0 %v195
    %229 = vmatpush.msra.mxu0 %v194
    %230 = vmatpush.msra.mxu0 %v193
    %231 = vmatmul.f32.gmra.mxu0 %v210
    %v232 = vpop.f32.mrf.mxu0
    %v233 = vadd.f32 %v213, %v232
    %234 = vmatmul.f32.gmra.mxu0 %v211
    %v235 = vpop.f32.mrf.mxu0
    %v236 = vadd.f32 %v213, %v235
    %237 = vdwg.mxu0
    %v238 = vlaneseq
    %v239 = vand.u32 %v238, 127
    %vm240 = vcmp.lt.s32.totalorder %v239, 16
    %v241 = vsel %vm240, %v233, -1e+30
    %v242 = vsel %vm240, %v236, -1e+30
    %243 = vmax.xlane.f32.xlu0 %v241
    %v244 = vpop.xlane.xlu0 %243
    %245 = vmax.xlane.f32.xlu0 %v242
    %v246 = vpop.xlane.xlu0 %245
    %v247 = vsub.f32 %v241, %v244
    %v248 = vsub.f32 %v242, %v246
    %v249 = vmul.f32 %v247, 1.442695
    %v250 = vpow.pop %v249
    %v251 = vmul.f32 %v248, 1.442695
    %v252 = vpow.pop %v251
    %253 = vadd.xlane.f32.xlu0 %v250
    %v254 = vpop.xlane.xlu0 %253
    %255 = vadd.xlane.f32.xlu0 %v252
    %v256 = vpop.xlane.xlu0 %255
    %v257 = vlog2.pop %v254
    %v258 = vmul.f32 %v257, 0.6931472
    %v259 = vlog2.pop %v256
    %v260 = vmul.f32 %v259, 0.6931472
    %v261 = vsub.f32 %v247, %v258
    %v262 = vsub.f32 %v248, %v260
    %263 = vst [vmem:[#allocation7] sm:$0xff] %v261
    %264 = vst [vmem:[#allocation7 + $0x8] sm:$0xff] %v262
    // Predicated region
    $region38: #{fused_mlp_forward.1} parent=1 // pred_check
      _
    $region39: #{fused_mlp_forward.1} parent=1 // pred_check_branch
      %266 = sbr.rel (0) target = $region41
    $region40: #{fused_mlp_forward.1} parent=1 // pred_region
      %268 = vsyncadd [#allocation4], 0
      %s269 = sshll.u32 [#allocation7], 4
      %s270 = int_to_ptr.vmem [resolvable:$true] %s269
      %s271 = sshll.u32 %s7, 4
      %s272 = int_to_ptr.hbm [resolvable:$true] %s271
      %277 = dma.vmem_to_hbm [thread:$0]  %s270, 256, %s272, [#allocation4], 128, 128, 8
    $region41: #{fused_mlp_forward.1} parent=1 // pred_fallthru
      _
    // Predicated region
    $region42: #{fused_mlp_forward.1} parent=1 // pred_check
      _
    $region43: #{fused_mlp_forward.1} parent=1 // pred_check_branch
      %279 = sbr.rel (0) target = $region45
    $region44: #{fused_mlp_forward.1} parent=1 // pred_region
      %281 = dma.done [#allocation4], 256
    $region45: #{fused_mlp_forward.1} parent=1 // pred_fallthru
      _
    %282 = vsyncpa [#allocation3], 1
    %283 = vsyncpa [#allocation6], 1
    %284 = vsyncpa [#allocation4], 1

// kernel: fused_mlp_forward.1
$region0: #{fused_mlp_forward.1}
  #allocation0 [shape = 'u32[]', space=smem, size = 0x4, offset = 0x4, fixed_abs, tag = 'smem constant byte address 0x4 - core index']
  #allocation1 [shape = 'u32[72,128]{1,0:T(1,128)}', space=vmem, size = 0x9000, scoped, tag = 'internal scratch']
  %s0 = inlined_call_operand.vmem [shape: bf16[16,32], index: 0, kind: input, shape index: {}]
  %s1 = inlined_call_operand.vmem [shape: bf16[32,128], index: 1, kind: input, shape index: {}]
  %s2 = inlined_call_operand.vmem [shape: f32[1,128], index: 2, kind: input, shape index: {}]
  %s3 = inlined_call_operand.hbm [shape: bf16[128,128], index: 3, kind: input, shape index: {}]
  %s4 = inlined_call_operand.vmem [shape: f32[1,128], index: 4, kind: input, shape index: {}]
  %s5 = inlined_call_operand.hbm [shape: f32[128,128], index: 5, kind: input, shape index: {}]
  %s6 = inlined_call_operand.vmem [shape: f32[1,128], index: 6, kind: input, shape index: {}]
  %s7 = inlined_call_operand.hbm [shape: f32[16,128], index: 7, kind: output, shape index: {}]
  %s8 = sld [smem:[#allocation0]]
  $region46: #{fused_mlp_forward.1} parent=0
    _
  %s10 = ssub.s32 1, %s8
  %s11 = scalar_select 0, %s10, %s8
  $region1: #{fused_mlp_forward.1} parent=0
    #allocation2 [shape = 'u8[32768]{0}', space=vmem, size = 0x8000, scoped, tag = 'input window, operand 3, single buffered']
    #allocation3 [shape = 's32[1]{0}', space=sflag, size = 0x4, scoped, tag = 'scoped memory for fused_mlp_forward.1']
    #allocation4 [shape = 's32[1]{0}', space=sflag, size = 0x4, scoped, tag = 'scoped memory for fused_mlp_forward.1']
    #allocation5 [shape = 'u8[65536]{0}', space=vmem, size = 0x10000, scoped, tag = 'input window, operand 5, single buffered']
    #allocation6 [shape = 's32[1]{0}', space=sflag, size = 0x4, scoped, tag = 'scoped memory for fused_mlp_forward.1']
    #allocation7 [shape = 'u8[8192]{0}', space=vmem, size = 0x2000, scoped, tag = 'output window, operand 0, single buffered']
    %12 = vsyncpa [#allocation3], 0
    %13 = vsyncpa [#allocation6], 0
    %14 = vsyncpa [#allocation4], 0
    // Predicated region
    $region2: #{fused_mlp_forward.1} parent=1 // pred_check
      _
    $region3: #{fused_mlp_forward.1} parent=1 // pred_check_branch
      %16 = sbr.rel (0) target = $region5
    $region4: #{fused_mlp_forward.1} parent=1 // pred_region
      _
    $region5: #{fused_mlp_forward.1} parent=1 // pred_fallthru
      _
    // Predicated region
    $region6: #{fused_mlp_forward.1} parent=1 // pred_check
      _
    $region7: #{fused_mlp_forward.1} parent=1 // pred_check_branch
      %18 = sbr.rel (0) target = $region9
    $region8: #{fused_mlp_forward.1} parent=1 // pred_region
      _
    $region9: #{fused_mlp_forward.1} parent=1 // pred_fallthru
      _
    // Predicated region
    $region10: #{fused_mlp_forward.1} parent=1 // pred_check
      _
    $region11: #{fused_mlp_forward.1} parent=1 // pred_check_branch
      %20 = sbr.rel (0) target = $region13
    $region12: #{fused_mlp_forward.1} parent=1 // pred_region
      _
    $region13: #{fused_mlp_forward.1} parent=1 // pred_fallthru
      _
    // Predicated region
    $region14: #{fused_mlp_forward.1} parent=1 // pred_check
      _
    $region15: #{fused_mlp_forward.1} parent=1 // pred_check_branch
      %22 = sbr.rel (0) target = $region17
    $region16: #{fused_mlp_forward.1} parent=1 // pred_region
      %24 = vsyncadd [#allocation3], 0
      %s25 = sshll.u32 %s3, 4
      %s26 = int_to_ptr.hbm [resolvable:$true] %s25
      %s27 = sshll.u32 [#allocation2], 4
      %s28 = int_to_ptr.vmem [resolvable:$true] %s27
      %33 = dma.hbm_to_vmem [thread:$0]  %s26, 1024, %s28, [#allocation3], 64, 64, 4
    $region17: #{fused_mlp_forward.1} parent=1 // pred_fallthru
      _
    // Predicated region
    $region18: #{fused_mlp_forward.1} parent=1 // pred_check
      _
    $region19: #{fused_mlp_forward.1} parent=1 // pred_check_branch
      %35 = sbr.rel (0) target = $region21
    $region20: #{fused_mlp_forward.1} parent=1 // pred_region
      _
    $region21: #{fused_mlp_forward.1} parent=1 // pred_fallthru
      _
    // Predicated region
    $region22: #{fused_mlp_forward.1} parent=1 // pred_check
      _
    $region23: #{fused_mlp_forward.1} parent=1 // pred_check_branch
      %37 = sbr.rel (0) target = $region25
    $region24: #{fused_mlp_forward.1} parent=1 // pred_region
      %39 = vsyncadd [#allocation6], 0
      %s40 = sshll.u32 %s5, 4
      %s41 = int_to_ptr.hbm [resolvable:$true] %s40
      %s42 = sshll.u32 [#allocation5], 4
      %s43 = int_to_ptr.vmem [resolvable:$true] %s42
      %48 = dma.hbm_to_vmem [thread:$0]  %s41, 2048, %s43, [#allocation6], 128, 128, 8
    $region25: #{fused_mlp_forward.1} parent=1 // pred_fallthru
      _
    // Predicated region
    $region26: #{fused_mlp_forward.1} parent=1 // pred_check
      _
    $region27: #{fused_mlp_forward.1} parent=1 // pred_check_branch
      %50 = sbr.rel (0) target = $region29
    $region28: #{fused_mlp_forward.1} parent=1 // pred_region
      _
    $region29: #{fused_mlp_forward.1} parent=1 // pred_fallthru
      _
    // Predicated region
    $region30: #{fused_mlp_forward.1} parent=1 // pred_check
      _
    $region31: #{fused_mlp_forward.1} parent=1 // pred_check_branch
      %52 = sbr.rel (0) target = $region33
    $region32: #{fused_mlp_forward.1} parent=1 // pred_region
      %54 = dma.done [#allocation3], 1024
    $region33: #{fused_mlp_forward.1} parent=1 // pred_fallthru
      _
    // Predicated region
    $region34: #{fused_mlp_forward.1} parent=1 // pred_check
      _
    $region35: #{fused_mlp_forward.1} parent=1 // pred_check_branch
      %56 = sbr.rel (0) target = $region37
    $region36: #{fused_mlp_forward.1} parent=1 // pred_region
      %58 = dma.done [#allocation6], 2048
    $region37: #{fused_mlp_forward.1} parent=1 // pred_fallthru
      _
    %v60 = vld [vmem:[%s0] sm:$0xf]
    %v61 = vld [vmem:[%s0 + $0x4] sm:$0xf]
    %v62 = vld [vmem:[%s1] sm:$0xf]
    %v63 = vld [vmem:[%s1 + $0x4] sm:$0xf]
    %v64 = vld [vmem:[%s1 + $0x8] sm:$0xf]
    %v65 = vld [vmem:[%s1 + $0xc] sm:$0xf]
    %v66 = vld [vmem:[%s2] sm:$0x1]
    %v68 = vperm.slane %v66, 0
    %v72 = vunpack.c.l.b16 %v60
    %v73 = vunpack.c.l.b16 %v61
    %v74 = vpack.c.b16 %v73, %v72
    %v79 = vunpack.c.l.b16 %v62
    %v80 = vunpack.c.l.b16 %v63
    %v81 = vunpack.c.l.b16 %v64
    %v82 = vunpack.c.l.b16 %v65
    %v83 = vpack.c.b16 %v80, %v79
    %v84 = vpack.c.b16 %v82, %v81
    %vm87 = vcmask 261120
    %v89 = vsel %vm87, %v74, 0
    %91 = vmatpush.bf16.msra.mxu0 0
    %92 = vmatpush.bf16.msra.mxu0 0
    %93 = vmatpush.bf16.msra.mxu0 0
    %94 = vmatpush.bf16.msra.mxu0 0
    %95 = vmatpush.bf16.msra.mxu0 0
    %96 = vmatpush.bf16.msra.mxu0 0
    %97 = vmatpush.bf16.msra.mxu0 %v84
    %98 = vmatpush.bf16.msra.mxu0 %v83
    %99 = vmatmul.bf16.gmra.mxu0 %v89
    %v100 = vpop.f32.mrf.mxu0
    %v101 = vadd.f32 %v68, %v100
    %v102 = vpop.f32.mrf.mxu0
    %v103 = vadd.f32 %v68, %v102
    %104 = vdwg.mxu0
    %v105 = vmax.f32 %v101, 0.0
    %v106 = vmax.f32 %v103, 0.0
    %v107 = vpack.c.bf16 %v106, %v105
    %v108 = vld [vmem:[#allocation2] sm:$0xf]
    %v109 = vld [vmem:[#allocation2 + $0x4] sm:$0xf]
    %v110 = vld [vmem:[#allocation2 + $0x8] sm:$0xf]
    %v111 = vld [vmem:[#allocation2 + $0xc] sm:$0xf]
    %v112 = vld [vmem:[#allocation2 + $0x10] sm:$0xf]
    %v113 = vld [vmem:[#allocation2 + $0x14] sm:$0xf]
    %v114 = vld [vmem:[#allocation2 + $0x18] sm:$0xf]
    %v115 = vld [vmem:[#allocation2 + $0x1c] sm:$0xf]
    %v116 = vld [vmem:[#allocation2 + $0x20] sm:$0xf]
    %v117 = vld [vmem:[#allocation2 + $0x24] sm:$0xf]
    %v118 = vld [vmem:[#allocation2 + $0x28] sm:$0xf]
    %v119 = vld [vmem:[#allocation2 + $0x2c] sm:$0xf]
    %v120 = vld [vmem:[#allocation2 + $0x30] sm:$0xf]
    %v121 = vld [vmem:[#allocation2 + $0x34] sm:$0xf]
    %v122 = vld [vmem:[#allocation2 + $0x38] sm:$0xf]
    %v123 = vld [vmem:[#allocation2 + $0x3c] sm:$0xf]
    %v124 = vld [vmem:[%s4] sm:$0x1]
    %v126 = vperm.slane %v124, 0
    %v144 = vunpack.c.l.b16 %v108
    %v145 = vunpack.c.l.b16 %v109
    %v146 = vunpack.c.l.b16 %v110
    %v147 = vunpack.c.l.b16 %v111
    %v148 = vunpack.c.l.b16 %v112
    %v149 = vunpack.c.l.b16 %v113
    %v150 = vunpack.c.l.b16 %v114
    %v151 = vunpack.c.l.b16 %v115
    %v152 = vunpack.c.l.b16 %v116
    %v153 = vunpack.c.l.b16 %v117
    %v154 = vunpack.c.l.b16 %v118
    %v155 = vunpack.c.l.b16 %v119
    %v156 = vunpack.c.l.b16 %v120
    %v157 = vunpack.c.l.b16 %v121
    %v158 = vunpack.c.l.b16 %v122
    %v159 = vunpack.c.l.b16 %v123
    %v160 = vpack.c.b16 %v145, %v144
    %v161 = vpack.c.b16 %v147, %v146
    %v162 = vpack.c.b16 %v149, %v148
    %v163 = vpack.c.b16 %v151, %v150
    %v164 = vpack.c.b16 %v153, %v152
    %v165 = vpack.c.b16 %v155, %v154
    %v166 = vpack.c.b16 %v157, %v156
    %v167 = vpack.c.b16 %v159, %v158
    %176 = vmatpush.bf16.msra.mxu0 %v167
    %177 = vmatpush.bf16.msra.mxu0 %v166
    %178 = vmatpush.bf16.msra.mxu0 %v165
    %179 = vmatpush.bf16.msra.mxu0 %v164
    %180 = vmatpush.bf16.msra.mxu0 %v163
    %181 = vmatpush.bf16.msra.mxu0 %v162
    %182 = vmatpush.bf16.msra.mxu0 %v161
    %183 = vmatpush.bf16.msra.mxu0 %v160
    %184 = vmatmul.bf16.gmra.mxu0 %v107
    %v185 = vpop.f32.mrf.mxu0
    %v186 = vadd.f32 %v126, %v185
    %v187 = vpop.f32.mrf.mxu0
    %v188 = vadd.f32 %v126, %v187
    %189 = vdwg.mxu0
    %v190 = vmax.f32 %v186, 0.0
    %v191 = vmax.f32 %v188, 0.0
    %v192 = vpack.c.bf16 %v191, %v190
    %v193 = vld [vmem:[#allocation5] sm:$0xff]
    %v194 = vld [vmem:[#allocation5 + $0x8] sm:$0xff]
    %v195 = vld [vmem:[#allocation5 + $0x10] sm:$0xff]
    %v196 = vld [vmem:[#allocation5 + $0x18] sm:$0xff]
    %v197 = vld [vmem:[#allocation5 + $0x20] sm:$0xff]
    %v198 = vld [vmem:[#allocation5 + $0x28] sm:$0xff]
    %v199 = vld [vmem:[#allocation5 + $0x30] sm:$0xff]
    %v200 = vld [vmem:[#allocation5 + $0x38] sm:$0xff]
    %v201 = vld [vmem:[#allocation5 + $0x40] sm:$0xff]
    %v202 = vld [vmem:[#allocation5 + $0x48] sm:$0xff]
    %v203 = vld [vmem:[#allocation5 + $0x50] sm:$0xff]
    %v204 = vld [vmem:[#allocation5 + $0x58] sm:$0xff]
    %v205 = vld [vmem:[#allocation5 + $0x60] sm:$0xff]
    %v206 = vld [vmem:[#allocation5 + $0x68] sm:$0xff]
    %v207 = vld [vmem:[#allocation5 + $0x70] sm:$0xff]
    %v208 = vld [vmem:[#allocation5 + $0x78] sm:$0xff]
    %v209 = vld [vmem:[%s6] sm:$0x1]
    %v210 = vunpack.c.l.bf16 %v192
    %v211 = vunpack.c.h.bf16 %v192
    %v213 = vperm.slane %v209, 0
    %215 = vmatpush.msra.mxu0 %v208
    %216 = vmatpush.msra.mxu0 %v207
    %217 = vmatpush.msra.mxu0 %v206
    %218 = vmatpush.msra.mxu0 %v205
    %219 = vmatpush.msra.mxu0 %v204
    %220 = vmatpush.msra.mxu0 %v203
    %221 = vmatpush.msra.mxu0 %v202
    %222 = vmatpush.msra.mxu0 %v201
    %223 = vmatpush.msra.mxu0 %v200
    %224 = vmatpush.msra.mxu0 %v199
    %225 = vmatpush.msra.mxu0 %v198
    %226 = vmatpush.msra.mxu0 %v197
    %227 = vmatpush.msra.mxu0 %v196
    %228 = vmatpush.msra.mxu0 %v195
    %229 = vmatpush.msra.mxu0 %v194
    %230 = vmatpush.msra.mxu0 %v193
    %231 = vmatmul.f32.gmra.mxu0 %v210
    %v232 = vpop.f32.mrf.mxu0
    %v233 = vadd.f32 %v213, %v232
    %234 = vmatmul.f32.gmra.mxu0 %v211
    %v235 = vpop.f32.mrf.mxu0
    %v236 = vadd.f32 %v213, %v235
    %237 = vdwg.mxu0
    %v238 = vlaneseq
    %v239 = vand.u32 %v238, 127
    %vm240 = vcmp.lt.s32.totalorder %v239, 16
    %v241 = vsel %vm240, %v233, -1e+30
    %v242 = vsel %vm240, %v236, -1e+30
    %243 = vmax.xlane.f32.xlu0 %v241
    %v244 = vpop.xlane.xlu0 %243
    %245 = vmax.xlane.f32.xlu0 %v242
    %v246 = vpop.xlane.xlu0 %245
    %v247 = vsub.f32 %v241, %v244
    %v248 = vsub.f32 %v242, %v246
    %v249 = vmul.f32 %v247, 1.442695
    %v250 = vpow.pop %v249
    %v251 = vmul.f32 %v248, 1.442695
    %v252 = vpow.pop %v251
    %253 = vadd.xlane.f32.xlu0 %v250
    %v254 = vpop.xlane.xlu0 %253
    %255 = vadd.xlane.f32.xlu0 %v252
    %v256 = vpop.xlane.xlu0 %255
    %v257 = vlog2.pop %v254
    %v258 = vmul.f32 %v257, 0.6931472
    %v259 = vlog2.pop %v256
    %v260 = vmul.f32 %v259, 0.6931472
    %v261 = vsub.f32 %v247, %v258
    %v262 = vsub.f32 %v248, %v260
    %263 = vst [vmem:[#allocation7] sm:$0xff] %v261
    %264 = vst [vmem:[#allocation7 + $0x8] sm:$0xff] %v262
    // Predicated region
    $region38: #{fused_mlp_forward.1} parent=1 // pred_check
      _
    $region39: #{fused_mlp_forward.1} parent=1 // pred_check_branch
      %266 = sbr.rel (0) target = $region41
    $region40: #{fused_mlp_forward.1} parent=1 // pred_region
      %268 = vsyncadd [#allocation4], 0
      %s269 = sshll.u32 [#allocation7], 4
      %s270 = int_to_ptr.vmem [resolvable:$true] %s269
      %s271 = sshll.u32 %s7, 4
      %s272 = int_to_ptr.hbm [resolvable:$true] %s271
      %277 = dma.vmem_to_hbm [thread:$0]  %s270, 256, %s272, [#allocation4], 128, 128, 8
    $region41: #{fused_mlp_forward.1} parent=1 // pred_fallthru
      _
    // Predicated region
    $region42: #{fused_mlp_forward.1} parent=1 // pred_check
      _
    $region43: #{fused_mlp_forward.1} parent=1 // pred_check_branch
      %279 = sbr.rel (0) target = $region45
    $region44: #{fused_mlp_forward.1} parent=1 // pred_region
      %281 = dma.done [#allocation4], 256
    $region45: #{fused_mlp_forward.1} parent=1 // pred_fallthru
      _
    %282 = vsyncpa [#allocation3], 1
    %283 = vsyncpa [#allocation6], 1
    %284 = vsyncpa [#allocation4], 1

</llo_original>
